<compile_context>
chip_gen: v7x
topology: tpu7x:2x2x1
jax: 0.10.0
libtpu: 0.0.40
codegen_flags: <defaults>
</compile_context>

<pallas_src>
import jax
import jax.numpy as jnp
from jax.experimental import pallas as pl
from jax.experimental.pallas import tpu as pltpu


def _model_kernel(w1_ref, w3_ref, w2_ref, b1_ref, b3_ref, b2_ref,  # SMEM
                  x_ref, n1_ref, n2_ref,                            # VMEM
                  o_ref):
    C = x_ref.shape[1]

    # Per-channel (8, L) sublane-dense tiles.
    x_rows = [x_ref[0, ci] for ci in range(C)]

    # layer 1: relu(W1 @ x + b1 - noise1)
    h1 = []
    for co in range(C):
        acc = b1_ref[co] - n1_ref[co]
        for ci in range(C):
            acc = acc + w1_ref[co, ci] * x_rows[ci]
        h1.append(jnp.maximum(acc, 0.0))

    # layer 2: relu(W3 @ h1 + b3 - noise2)
    h2 = []
    for co in range(C):
        acc = b3_ref[co] - n2_ref[co]
        for ci in range(C):
            acc = acc + w3_ref[co, ci] * h1[ci]
        h2.append(jnp.maximum(acc, 0.0))

    # layer 3: W2 @ h2 + b2 -- direct per-channel stores (no concatenate).
    for co in range(C):
        acc = w2_ref[co, 0] * h2[0] + b2_ref[co]
        for ci in range(1, C):
            acc = acc + w2_ref[co, ci] * h2[ci]
        o_ref[0, co] = acc


def model_forward(x, w1, b1, w2, b2, w3, b3, noise1, noise2):
    """x: (N, C, H, W) f32; weights (C, C); biases (C,); noise (C, H, W)."""
    N, C, H, W = x.shape
    M = H * W

    # Free contiguous reshape to a sublane-dense (SUB, L) spatial slab.
    SUB = 8 if M % 8 == 0 else 1
    L = M // SUB

    x_r = x.reshape(N, C, SUB, L)
    n1_r = noise1.reshape(C, SUB, L)
    n2_r = noise2.reshape(C, SUB, L)

    smem_spec = pl.BlockSpec(memory_space=pltpu.MemorySpace.SMEM)

    out = pl.pallas_call(
        _model_kernel,
        out_shape=jax.ShapeDtypeStruct((N, C, SUB, L), jnp.float32),
        grid=(N,),
        in_specs=[
            smem_spec,                                            # w1 (C, C)
            smem_spec,                                            # w3 (C, C)
            smem_spec,                                            # w2 (C, C)
            smem_spec,                                            # b1 (C,)
            smem_spec,                                            # b3 (C,)
            smem_spec,                                            # b2 (C,)
            pl.BlockSpec((1, C, SUB, L), lambda n: (n, 0, 0, 0)),  # x
            pl.BlockSpec((C, SUB, L), lambda n: (0, 0, 0)),        # noise1
            pl.BlockSpec((C, SUB, L), lambda n: (0, 0, 0)),        # noise2
        ],
        out_specs=pl.BlockSpec((1, C, SUB, L), lambda n: (n, 0, 0, 0)),
        compiler_params=pltpu.CompilerParams(
            dimension_semantics=("parallel",)),
    )(w1, w3, w2, b1, b3, b2, x_r, n1_r, n2_r)

    # (N, C, SUB, L) -> NCHW: free reshape.
    return out.reshape(N, C, H, W)


def _reference_forward(x, w1, b1, w2, b2, w3, b3, noise1, noise2):
    """Pure-JAX reference (1x1 convs as channel einsums)."""
    def conv1x1(t, w, b):
        return jnp.einsum('oi,nihw->nohw', w, t) + b[None, :, None, None]
    v1 = conv1x1(x, w1, b1)
    v3 = jnp.maximum(v1 - noise1[None], 0.0)
    v4 = conv1x1(v3, w3, b3)
    v6 = jnp.maximum(v4 - noise2[None], 0.0)
    return conv1x1(v6, w2, b2)


def _init_params(key, c):
    """Deterministic stand-in for PyTorch Conv2d(3,3,1) default init."""
    ks = jax.random.split(key, 6)
    bound = 1.0 / jnp.sqrt(float(c))  # fan_in = c * 1 * 1
    w1 = jax.random.uniform(ks[0], (c, c), jnp.float32, -bound, bound)
    b1 = jax.random.uniform(ks[1], (c,), jnp.float32, -bound, bound)
    w2 = jax.random.uniform(ks[2], (c, c), jnp.float32, -bound, bound)
    b2 = jax.random.uniform(ks[3], (c,), jnp.float32, -bound, bound)
    w3 = jax.random.uniform(ks[4], (c, c), jnp.float32, -bound, bound)
    b3 = jax.random.uniform(ks[5], (c,), jnp.float32, -bound, bound)
    return w1, b1, w2, b2, w3, b3


if __name__ == "__main__":
    key = jax.random.PRNGKey(0)
    k_x, k_p, k_n1, k_n2 = jax.random.split(key, 4)

    # Spatial size 36 so the (3, 36, 36) subtraction tensors broadcast as the
    # module's forward implies.
    N, C, H, W = 1, 3, 36, 36
    x = jax.random.normal(k_x, (N, C, H, W), jnp.float32)

    w1, b1, w2, b2, w3, b3 = _init_params(k_p, C)

    # The module samples torch.randn((3,36,36)) inside forward; we generate
    # the noise deterministically here and pass it in instead.
    noise1 = jax.random.normal(k_n1, (C, H, W), jnp.float32)
    noise2 = jax.random.normal(k_n2, (C, H, W), jnp.float32)

    out = model_forward(x, w1, b1, w2, b2, w3, b3, noise1, noise2)
    jax.block_until_ready(out)
    assert out.shape == (N, C, H, W)

    ref = _reference_forward(x, w1, b1, w2, b2, w3, b3, noise1, noise2)
    assert jnp.allclose(out, ref, atol=1e-5, rtol=1e-5)

    print("KERNEL_OK")
</pallas_src>

<mosaic_0001>
module attributes {stable_mosaic.version = 11 : i64} {
  func.func @_model_kernel(%arg0: i32, %arg1: memref<3x3xf32, #tpu.memory_space<smem>>, %arg2: memref<3x3xf32, #tpu.memory_space<smem>>, %arg3: memref<3x3xf32, #tpu.memory_space<smem>>, %arg4: memref<3xf32, #tpu.memory_space<smem>>, %arg5: memref<3xf32, #tpu.memory_space<smem>>, %arg6: memref<3xf32, #tpu.memory_space<smem>>, %arg7: memref<1x3x8x162xf32, #tpu.memory_space<vmem>>, %arg8: memref<3x8x162xf32, #tpu.memory_space<vmem>>, %arg9: memref<3x8x162xf32, #tpu.memory_space<vmem>>, %arg10: memref<1x3x8x162xf32, #tpu.memory_space<vmem>>) attributes {dimension_semantics = [#tpu.dimension_semantics<parallel>], iteration_bounds = array<i64: 1>, scalar_prefetch = 0 : i64, scratch_operands = 0 : i64, tpu.core_type = #tpu.core_type<tc>, window_params = [{transform_indices = @transform_0, window_bounds = array<i64: 3, 3>}, {transform_indices = @transform_1, window_bounds = array<i64: 3, 3>}, {transform_indices = @transform_2, window_bounds = array<i64: 3, 3>}, {transform_indices = @transform_3, window_bounds = array<i64: 3>}, {transform_indices = @transform_4, window_bounds = array<i64: 3>}, {transform_indices = @transform_5, window_bounds = array<i64: 3>}, {transform_indices = @transform_6, window_bounds = array<i64: 1, 3, 8, 162>}, {pipeline_mode = #tpu.pipeline_mode<synchronous>, transform_indices = @transform_7, window_bounds = array<i64: 3, 8, 162>}, {pipeline_mode = #tpu.pipeline_mode<synchronous>, transform_indices = @transform_8, window_bounds = array<i64: 3, 8, 162>}, {transform_indices = @transform_9, window_bounds = array<i64: 1, 3, 8, 162>}]} {
    %c0 = arith.constant 0 : index
    %c0_0 = arith.constant 0 : index
    %c0_1 = arith.constant 0 : index
    %c0_2 = arith.constant 0 : index
    %0 = vector.load %arg7[%c0, %c0_0, %c0_1, %c0_2] : memref<1x3x8x162xf32, #tpu.memory_space<vmem>>, vector<1x1x8x162xf32>
    %1 = vector.shape_cast %0 : vector<1x1x8x162xf32> to vector<8x162xf32>
    %c0_3 = arith.constant 0 : index
    %c1 = arith.constant 1 : index
    %c0_4 = arith.constant 0 : index
    %c0_5 = arith.constant 0 : index
    %2 = vector.load %arg7[%c0_3, %c1, %c0_4, %c0_5] : memref<1x3x8x162xf32, #tpu.memory_space<vmem>>, vector<1x1x8x162xf32>
    %3 = vector.shape_cast %2 : vector<1x1x8x162xf32> to vector<8x162xf32>
    %c0_6 = arith.constant 0 : index
    %c2 = arith.constant 2 : index
    %c0_7 = arith.constant 0 : index
    %c0_8 = arith.constant 0 : index
    %4 = vector.load %arg7[%c0_6, %c2, %c0_7, %c0_8] : memref<1x3x8x162xf32, #tpu.memory_space<vmem>>, vector<1x1x8x162xf32>
    %5 = vector.shape_cast %4 : vector<1x1x8x162xf32> to vector<8x162xf32>
    %c0_9 = arith.constant 0 : index
    %6 = memref.load %arg4[%c0_9] : memref<3xf32, #tpu.memory_space<smem>>
    %c0_10 = arith.constant 0 : index
    %c0_11 = arith.constant 0 : index
    %c0_12 = arith.constant 0 : index
    %7 = vector.load %arg8[%c0_10, %c0_11, %c0_12] : memref<3x8x162xf32, #tpu.memory_space<vmem>>, vector<1x8x162xf32>
    %8 = vector.shape_cast %7 : vector<1x8x162xf32> to vector<8x162xf32>
    %9 = vector.broadcast %6 : f32 to vector<8x162xf32>
    %10 = arith.subf %9, %8 : vector<8x162xf32>
    %c0_13 = arith.constant 0 : index
    %c0_14 = arith.constant 0 : index
    %11 = memref.load %arg1[%c0_13, %c0_14] : memref<3x3xf32, #tpu.memory_space<smem>>
    %12 = vector.broadcast %11 : f32 to vector<8x162xf32>
    %13 = arith.mulf %12, %1 : vector<8x162xf32>
    %14 = arith.addf %10, %13 : vector<8x162xf32>
    %c0_15 = arith.constant 0 : index
    %c1_16 = arith.constant 1 : index
    %15 = memref.load %arg1[%c0_15, %c1_16] : memref<3x3xf32, #tpu.memory_space<smem>>
    %16 = vector.broadcast %15 : f32 to vector<8x162xf32>
    %17 = arith.mulf %16, %3 : vector<8x162xf32>
    %18 = arith.addf %14, %17 : vector<8x162xf32>
    %c0_17 = arith.constant 0 : index
    %c2_18 = arith.constant 2 : index
    %19 = memref.load %arg1[%c0_17, %c2_18] : memref<3x3xf32, #tpu.memory_space<smem>>
    %20 = vector.broadcast %19 : f32 to vector<8x162xf32>
    %21 = arith.mulf %20, %5 : vector<8x162xf32>
    %22 = arith.addf %18, %21 : vector<8x162xf32>
    %cst = arith.constant 0.000000e+00 : f32
    %23 = vector.broadcast %cst : f32 to vector<8x162xf32>
    %24 = arith.maximumf %22, %23 : vector<8x162xf32>
    %c1_19 = arith.constant 1 : index
    %25 = memref.load %arg4[%c1_19] : memref<3xf32, #tpu.memory_space<smem>>
    %c1_20 = arith.constant 1 : index
    %c0_21 = arith.constant 0 : index
    %c0_22 = arith.constant 0 : index
    %26 = vector.load %arg8[%c1_20, %c0_21, %c0_22] : memref<3x8x162xf32, #tpu.memory_space<vmem>>, vector<1x8x162xf32>
    %27 = vector.shape_cast %26 : vector<1x8x162xf32> to vector<8x162xf32>
    %28 = vector.broadcast %25 : f32 to vector<8x162xf32>
    %29 = arith.subf %28, %27 : vector<8x162xf32>
    %c1_23 = arith.constant 1 : index
    %c0_24 = arith.constant 0 : index
    %30 = memref.load %arg1[%c1_23, %c0_24] : memref<3x3xf32, #tpu.memory_space<smem>>
    %31 = vector.broadcast %30 : f32 to vector<8x162xf32>
    %32 = arith.mulf %31, %1 : vector<8x162xf32>
    %33 = arith.addf %29, %32 : vector<8x162xf32>
    %c1_25 = arith.constant 1 : index
    %c1_26 = arith.constant 1 : index
    %34 = memref.load %arg1[%c1_25, %c1_26] : memref<3x3xf32, #tpu.memory_space<smem>>
    %35 = vector.broadcast %34 : f32 to vector<8x162xf32>
    %36 = arith.mulf %35, %3 : vector<8x162xf32>
    %37 = arith.addf %33, %36 : vector<8x162xf32>
    %c1_27 = arith.constant 1 : index
    %c2_28 = arith.constant 2 : index
    %38 = memref.load %arg1[%c1_27, %c2_28] : memref<3x3xf32, #tpu.memory_space<smem>>
    %39 = vector.broadcast %38 : f32 to vector<8x162xf32>
    %40 = arith.mulf %39, %5 : vector<8x162xf32>
    %41 = arith.addf %37, %40 : vector<8x162xf32>
    %cst_29 = arith.constant 0.000000e+00 : f32
    %42 = vector.broadcast %cst_29 : f32 to vector<8x162xf32>
    %43 = arith.maximumf %41, %42 : vector<8x162xf32>
    %c2_30 = arith.constant 2 : index
    %44 = memref.load %arg4[%c2_30] : memref<3xf32, #tpu.memory_space<smem>>
    %c2_31 = arith.constant 2 : index
    %c0_32 = arith.constant 0 : index
    %c0_33 = arith.constant 0 : index
    %45 = vector.load %arg8[%c2_31, %c0_32, %c0_33] : memref<3x8x162xf32, #tpu.memory_space<vmem>>, vector<1x8x162xf32>
    %46 = vector.shape_cast %45 : vector<1x8x162xf32> to vector<8x162xf32>
    %47 = vector.broadcast %44 : f32 to vector<8x162xf32>
    %48 = arith.subf %47, %46 : vector<8x162xf32>
    %c2_34 = arith.constant 2 : index
    %c0_35 = arith.constant 0 : index
    %49 = memref.load %arg1[%c2_34, %c0_35] : memref<3x3xf32, #tpu.memory_space<smem>>
    %50 = vector.broadcast %49 : f32 to vector<8x162xf32>
    %51 = arith.mulf %50, %1 : vector<8x162xf32>
    %52 = arith.addf %48, %51 : vector<8x162xf32>
    %c2_36 = arith.constant 2 : index
    %c1_37 = arith.constant 1 : index
    %53 = memref.load %arg1[%c2_36, %c1_37] : memref<3x3xf32, #tpu.memory_space<smem>>
    %54 = vector.broadcast %53 : f32 to vector<8x162xf32>
    %55 = arith.mulf %54, %3 : vector<8x162xf32>
    %56 = arith.addf %52, %55 : vector<8x162xf32>
    %c2_38 = arith.constant 2 : index
    %c2_39 = arith.constant 2 : index
    %57 = memref.load %arg1[%c2_38, %c2_39] : memref<3x3xf32, #tpu.memory_space<smem>>
    %58 = vector.broadcast %57 : f32 to vector<8x162xf32>
    %59 = arith.mulf %58, %5 : vector<8x162xf32>
    %60 = arith.addf %56, %59 : vector<8x162xf32>
    %cst_40 = arith.constant 0.000000e+00 : f32
    %61 = vector.broadcast %cst_40 : f32 to vector<8x162xf32>
    %62 = arith.maximumf %60, %61 : vector<8x162xf32>
    %c0_41 = arith.constant 0 : index
    %63 = memref.load %arg5[%c0_41] : memref<3xf32, #tpu.memory_space<smem>>
    %c0_42 = arith.constant 0 : index
    %c0_43 = arith.constant 0 : index
    %c0_44 = arith.constant 0 : index
    %64 = vector.load %arg9[%c0_42, %c0_43, %c0_44] : memref<3x8x162xf32, #tpu.memory_space<vmem>>, vector<1x8x162xf32>
    %65 = vector.shape_cast %64 : vector<1x8x162xf32> to vector<8x162xf32>
    %66 = vector.broadcast %63 : f32 to vector<8x162xf32>
    %67 = arith.subf %66, %65 : vector<8x162xf32>
    %c0_45 = arith.constant 0 : index
    %c0_46 = arith.constant 0 : index
    %68 = memref.load %arg2[%c0_45, %c0_46] : memref<3x3xf32, #tpu.memory_space<smem>>
    %69 = vector.broadcast %68 : f32 to vector<8x162xf32>
    %70 = arith.mulf %69, %24 : vector<8x162xf32>
    %71 = arith.addf %67, %70 : vector<8x162xf32>
    %c0_47 = arith.constant 0 : index
    %c1_48 = arith.constant 1 : index
    %72 = memref.load %arg2[%c0_47, %c1_48] : memref<3x3xf32, #tpu.memory_space<smem>>
    %73 = vector.broadcast %72 : f32 to vector<8x162xf32>
    %74 = arith.mulf %73, %43 : vector<8x162xf32>
    %75 = arith.addf %71, %74 : vector<8x162xf32>
    %c0_49 = arith.constant 0 : index
    %c2_50 = arith.constant 2 : index
    %76 = memref.load %arg2[%c0_49, %c2_50] : memref<3x3xf32, #tpu.memory_space<smem>>
    %77 = vector.broadcast %76 : f32 to vector<8x162xf32>
    %78 = arith.mulf %77, %62 : vector<8x162xf32>
    %79 = arith.addf %75, %78 : vector<8x162xf32>
    %cst_51 = arith.constant 0.000000e+00 : f32
    %80 = vector.broadcast %cst_51 : f32 to vector<8x162xf32>
    %81 = arith.maximumf %79, %80 : vector<8x162xf32>
    %c1_52 = arith.constant 1 : index
    %82 = memref.load %arg5[%c1_52] : memref<3xf32, #tpu.memory_space<smem>>
    %c1_53 = arith.constant 1 : index
    %c0_54 = arith.constant 0 : index
    %c0_55 = arith.constant 0 : index
    %83 = vector.load %arg9[%c1_53, %c0_54, %c0_55] : memref<3x8x162xf32, #tpu.memory_space<vmem>>, vector<1x8x162xf32>
    %84 = vector.shape_cast %83 : vector<1x8x162xf32> to vector<8x162xf32>
    %85 = vector.broadcast %82 : f32 to vector<8x162xf32>
    %86 = arith.subf %85, %84 : vector<8x162xf32>
    %c1_56 = arith.constant 1 : index
    %c0_57 = arith.constant 0 : index
    %87 = memref.load %arg2[%c1_56, %c0_57] : memref<3x3xf32, #tpu.memory_space<smem>>
    %88 = vector.broadcast %87 : f32 to vector<8x162xf32>
    %89 = arith.mulf %88, %24 : vector<8x162xf32>
    %90 = arith.addf %86, %89 : vector<8x162xf32>
    %c1_58 = arith.constant 1 : index
    %c1_59 = arith.constant 1 : index
    %91 = memref.load %arg2[%c1_58, %c1_59] : memref<3x3xf32, #tpu.memory_space<smem>>
    %92 = vector.broadcast %91 : f32 to vector<8x162xf32>
    %93 = arith.mulf %92, %43 : vector<8x162xf32>
    %94 = arith.addf %90, %93 : vector<8x162xf32>
    %c1_60 = arith.constant 1 : index
    %c2_61 = arith.constant 2 : index
    %95 = memref.load %arg2[%c1_60, %c2_61] : memref<3x3xf32, #tpu.memory_space<smem>>
    %96 = vector.broadcast %95 : f32 to vector<8x162xf32>
    %97 = arith.mulf %96, %62 : vector<8x162xf32>
    %98 = arith.addf %94, %97 : vector<8x162xf32>
    %cst_62 = arith.constant 0.000000e+00 : f32
    %99 = vector.broadcast %cst_62 : f32 to vector<8x162xf32>
    %100 = arith.maximumf %98, %99 : vector<8x162xf32>
    %c2_63 = arith.constant 2 : index
    %101 = memref.load %arg5[%c2_63] : memref<3xf32, #tpu.memory_space<smem>>
    %c2_64 = arith.constant 2 : index
    %c0_65 = arith.constant 0 : index
    %c0_66 = arith.constant 0 : index
    %102 = vector.load %arg9[%c2_64, %c0_65, %c0_66] : memref<3x8x162xf32, #tpu.memory_space<vmem>>, vector<1x8x162xf32>
    %103 = vector.shape_cast %102 : vector<1x8x162xf32> to vector<8x162xf32>
    %104 = vector.broadcast %101 : f32 to vector<8x162xf32>
    %105 = arith.subf %104, %103 : vector<8x162xf32>
    %c2_67 = arith.constant 2 : index
    %c0_68 = arith.constant 0 : index
    %106 = memref.load %arg2[%c2_67, %c0_68] : memref<3x3xf32, #tpu.memory_space<smem>>
    %107 = vector.broadcast %106 : f32 to vector<8x162xf32>
    %108 = arith.mulf %107, %24 : vector<8x162xf32>
    %109 = arith.addf %105, %108 : vector<8x162xf32>
    %c2_69 = arith.constant 2 : index
    %c1_70 = arith.constant 1 : index
    %110 = memref.load %arg2[%c2_69, %c1_70] : memref<3x3xf32, #tpu.memory_space<smem>>
    %111 = vector.broadcast %110 : f32 to vector<8x162xf32>
    %112 = arith.mulf %111, %43 : vector<8x162xf32>
    %113 = arith.addf %109, %112 : vector<8x162xf32>
    %c2_71 = arith.constant 2 : index
    %c2_72 = arith.constant 2 : index
    %114 = memref.load %arg2[%c2_71, %c2_72] : memref<3x3xf32, #tpu.memory_space<smem>>
    %115 = vector.broadcast %114 : f32 to vector<8x162xf32>
    %116 = arith.mulf %115, %62 : vector<8x162xf32>
    %117 = arith.addf %113, %116 : vector<8x162xf32>
    %cst_73 = arith.constant 0.000000e+00 : f32
    %118 = vector.broadcast %cst_73 : f32 to vector<8x162xf32>
    %119 = arith.maximumf %117, %118 : vector<8x162xf32>
    %c0_74 = arith.constant 0 : index
    %c0_75 = arith.constant 0 : index
    %120 = memref.load %arg3[%c0_74, %c0_75] : memref<3x3xf32, #tpu.memory_space<smem>>
    %121 = vector.broadcast %120 : f32 to vector<8x162xf32>
    %122 = arith.mulf %121, %81 : vector<8x162xf32>
    %c0_76 = arith.constant 0 : index
    %123 = memref.load %arg6[%c0_76] : memref<3xf32, #tpu.memory_space<smem>>
    %124 = vector.broadcast %123 : f32 to vector<8x162xf32>
    %125 = arith.addf %122, %124 : vector<8x162xf32>
    %c0_77 = arith.constant 0 : index
    %c1_78 = arith.constant 1 : index
    %126 = memref.load %arg3[%c0_77, %c1_78] : memref<3x3xf32, #tpu.memory_space<smem>>
    %127 = vector.broadcast %126 : f32 to vector<8x162xf32>
    %128 = arith.mulf %127, %100 : vector<8x162xf32>
    %129 = arith.addf %125, %128 : vector<8x162xf32>
    %c0_79 = arith.constant 0 : index
    %c2_80 = arith.constant 2 : index
    %130 = memref.load %arg3[%c0_79, %c2_80] : memref<3x3xf32, #tpu.memory_space<smem>>
    %131 = vector.broadcast %130 : f32 to vector<8x162xf32>
    %132 = arith.mulf %131, %119 : vector<8x162xf32>
    %133 = arith.addf %129, %132 : vector<8x162xf32>
    %c0_81 = arith.constant 0 : index
    %c0_82 = arith.constant 0 : index
    %c0_83 = arith.constant 0 : index
    %c0_84 = arith.constant 0 : index
    %134 = vector.load %arg10[%c0_81, %c0_82, %c0_83, %c0_84] : memref<1x3x8x162xf32, #tpu.memory_space<vmem>>, vector<1x1x8x162xf32>
    %135 = vector.shape_cast %134 : vector<1x1x8x162xf32> to vector<8x162xf32>
    %136 = vector.shape_cast %133 : vector<8x162xf32> to vector<1x1x8x162xf32>
    tpu.vector_store %arg10[%c0_81, %c0_82, %c0_83, %c0_84], %136 {strides = array<i32>} : memref<1x3x8x162xf32, #tpu.memory_space<vmem>>, vector<1x1x8x162xf32>,
    %c1_85 = arith.constant 1 : index
    %c0_86 = arith.constant 0 : index
    %137 = memref.load %arg3[%c1_85, %c0_86] : memref<3x3xf32, #tpu.memory_space<smem>>
    %138 = vector.broadcast %137 : f32 to vector<8x162xf32>
    %139 = arith.mulf %138, %81 : vector<8x162xf32>
    %c1_87 = arith.constant 1 : index
    %140 = memref.load %arg6[%c1_87] : memref<3xf32, #tpu.memory_space<smem>>
    %141 = vector.broadcast %140 : f32 to vector<8x162xf32>
    %142 = arith.addf %139, %141 : vector<8x162xf32>
    %c1_88 = arith.constant 1 : index
    %c1_89 = arith.constant 1 : index
    %143 = memref.load %arg3[%c1_88, %c1_89] : memref<3x3xf32, #tpu.memory_space<smem>>
    %144 = vector.broadcast %143 : f32 to vector<8x162xf32>
    %145 = arith.mulf %144, %100 : vector<8x162xf32>
    %146 = arith.addf %142, %145 : vector<8x162xf32>
    %c1_90 = arith.constant 1 : index
    %c2_91 = arith.constant 2 : index
    %147 = memref.load %arg3[%c1_90, %c2_91] : memref<3x3xf32, #tpu.memory_space<smem>>
    %148 = vector.broadcast %147 : f32 to vector<8x162xf32>
    %149 = arith.mulf %148, %119 : vector<8x162xf32>
    %150 = arith.addf %146, %149 : vector<8x162xf32>
    %c0_92 = arith.constant 0 : index
    %c1_93 = arith.constant 1 : index
    %c0_94 = arith.constant 0 : index
    %c0_95 = arith.constant 0 : index
    %151 = vector.load %arg10[%c0_92, %c1_93, %c0_94, %c0_95] : memref<1x3x8x162xf32, #tpu.memory_space<vmem>>, vector<1x1x8x162xf32>
    %152 = vector.shape_cast %151 : vector<1x1x8x162xf32> to vector<8x162xf32>
    %153 = vector.shape_cast %150 : vector<8x162xf32> to vector<1x1x8x162xf32>
    tpu.vector_store %arg10[%c0_92, %c1_93, %c0_94, %c0_95], %153 {strides = array<i32>} : memref<1x3x8x162xf32, #tpu.memory_space<vmem>>, vector<1x1x8x162xf32>,
    %c2_96 = arith.constant 2 : index
    %c0_97 = arith.constant 0 : index
    %154 = memref.load %arg3[%c2_96, %c0_97] : memref<3x3xf32, #tpu.memory_space<smem>>
    %155 = vector.broadcast %154 : f32 to vector<8x162xf32>
    %156 = arith.mulf %155, %81 : vector<8x162xf32>
    %c2_98 = arith.constant 2 : index
    %157 = memref.load %arg6[%c2_98] : memref<3xf32, #tpu.memory_space<smem>>
    %158 = vector.broadcast %157 : f32 to vector<8x162xf32>
    %159 = arith.addf %156, %158 : vector<8x162xf32>
    %c2_99 = arith.constant 2 : index
    %c1_100 = arith.constant 1 : index
    %160 = memref.load %arg3[%c2_99, %c1_100] : memref<3x3xf32, #tpu.memory_space<smem>>
    %161 = vector.broadcast %160 : f32 to vector<8x162xf32>
    %162 = arith.mulf %161, %100 : vector<8x162xf32>
    %163 = arith.addf %159, %162 : vector<8x162xf32>
    %c2_101 = arith.constant 2 : index
    %c2_102 = arith.constant 2 : index
    %164 = memref.load %arg3[%c2_101, %c2_102] : memref<3x3xf32, #tpu.memory_space<smem>>
    %165 = vector.broadcast %164 : f32 to vector<8x162xf32>
    %166 = arith.mulf %165, %119 : vector<8x162xf32>
    %167 = arith.addf %163, %166 : vector<8x162xf32>
    %c0_103 = arith.constant 0 : index
    %c2_104 = arith.constant 2 : index
    %c0_105 = arith.constant 0 : index
    %c0_106 = arith.constant 0 : index
    %168 = vector.load %arg10[%c0_103, %c2_104, %c0_105, %c0_106] : memref<1x3x8x162xf32, #tpu.memory_space<vmem>>, vector<1x1x8x162xf32>
    %169 = vector.shape_cast %168 : vector<1x1x8x162xf32> to vector<8x162xf32>
    %170 = vector.shape_cast %167 : vector<8x162xf32> to vector<1x1x8x162xf32>
    tpu.vector_store %arg10[%c0_103, %c2_104, %c0_105, %c0_106], %170 {strides = array<i32>} : memref<1x3x8x162xf32, #tpu.memory_space<vmem>>, vector<1x1x8x162xf32>,
    return
  }
  func.func @transform_0(%arg0: i32) -> (i32, i32) {
    %c0_i32 = arith.constant 0 : i32
    %c0_i32_0 = arith.constant 0 : i32
    %c0_i32_1 = arith.constant 0 : i32
    return %c0_i32, %c0_i32_0 : i32, i32
  }
  func.func @transform_1(%arg0: i32) -> (i32, i32) {
    %c0_i32 = arith.constant 0 : i32
    %c0_i32_0 = arith.constant 0 : i32
    %c0_i32_1 = arith.constant 0 : i32
    return %c0_i32, %c0_i32_0 : i32, i32
  }
  func.func @transform_2(%arg0: i32) -> (i32, i32) {
    %c0_i32 = arith.constant 0 : i32
    %c0_i32_0 = arith.constant 0 : i32
    %c0_i32_1 = arith.constant 0 : i32
    return %c0_i32, %c0_i32_0 : i32, i32
  }
  func.func @transform_3(%arg0: i32) -> i32 {
    %c0_i32 = arith.constant 0 : i32
    %c0_i32_0 = arith.constant 0 : i32
    return %c0_i32 : i32
  }
  func.func @transform_4(%arg0: i32) -> i32 {
    %c0_i32 = arith.constant 0 : i32
    %c0_i32_0 = arith.constant 0 : i32
    return %c0_i32 : i32
  }
  func.func @transform_5(%arg0: i32) -> i32 {
    %c0_i32 = arith.constant 0 : i32
    %c0_i32_0 = arith.constant 0 : i32
    return %c0_i32 : i32
  }
  func.func @transform_6(%arg0: i32) -> (i32, i32, i32, i32) {
    %c0_i32 = arith.constant 0 : i32
    %c0_i32_0 = arith.constant 0 : i32
    %c0_i32_1 = arith.constant 0 : i32
    %c0_i32_2 = arith.constant 0 : i32
    return %arg0, %c0_i32, %c0_i32_0, %c0_i32_1 : i32, i32, i32, i32
  }
  func.func @transform_7(%arg0: i32) -> (i32, i32, i32) {
    %c0_i32 = arith.constant 0 : i32
    %c0_i32_0 = arith.constant 0 : i32
    %c0_i32_1 = arith.constant 0 : i32
    %c0_i32_2 = arith.constant 0 : i32
    return %c0_i32, %c0_i32_0, %c0_i32_1 : i32, i32, i32
  }
  func.func @transform_8(%arg0: i32) -> (i32, i32, i32) {
    %c0_i32 = arith.constant 0 : i32
    %c0_i32_0 = arith.constant 0 : i32
    %c0_i32_1 = arith.constant 0 : i32
    %c0_i32_2 = arith.constant 0 : i32
    return %c0_i32, %c0_i32_0, %c0_i32_1 : i32, i32, i32
  }
  func.func @transform_9(%arg0: i32) -> (i32, i32, i32, i32) {
    %c0_i32 = arith.constant 0 : i32
    %c0_i32_0 = arith.constant 0 : i32
    %c0_i32_1 = arith.constant 0 : i32
    %c0_i32_2 = arith.constant 0 : i32
    return %arg0, %c0_i32, %c0_i32_0, %c0_i32_1 : i32, i32, i32, i32
  }
}

</mosaic_0001>

<llo_original>
// kernel: tpu_custom_call.1
$region0: #{tpu_custom_call.1}
  #allocation0 [shape = 'u32[]', space=smem, size = 0x4, offset = 0x4, fixed_abs, tag = 'smem constant byte address 0x4 - core index']
  #allocation1 [shape = 'u32[144,128]{1,0:T(1,128)}', space=vmem, size = 0x12000, scoped, tag = 'internal scratch']
  %s0 = inlined_call_operand.hbm [shape: f32[3,3], index: 0, kind: input, shape index: {}]
  %s1 = inlined_call_operand.hbm [shape: f32[3,3], index: 1, kind: input, shape index: {}]
  %s2 = inlined_call_operand.vmem [shape: f32[3,3], index: 2, kind: input, shape index: {}]
  %s3 = inlined_call_operand.vmem [shape: f32[3], index: 3, kind: input, shape index: {}]
  %s4 = inlined_call_operand.vmem [shape: f32[3], index: 4, kind: input, shape index: {}]
  %s5 = inlined_call_operand.vmem [shape: f32[3], index: 5, kind: input, shape index: {}]
  %s6 = inlined_call_operand.hbm [shape: f32[1,3,8,162], index: 6, kind: input, shape index: {}]
  %s7 = inlined_call_operand.hbm [shape: f32[3,8,162], index: 7, kind: input, shape index: {}]
  %s8 = inlined_call_operand.hbm [shape: f32[3,8,162], index: 8, kind: input, shape index: {}]
  %s9 = inlined_call_operand.hbm [shape: f32[1,3,8,162], index: 9, kind: output, shape index: {}]
  %s10 = sld [smem:[#allocation0]]
  $region82: #{tpu_custom_call.1} parent=0
    _
  %s12 = ssub.s32 1, %s10
  %s13 = scalar_select 0, %s12, %s10
  $region1: #{tpu_custom_call.1} parent=0
    #allocation2 [shape = 'u8[2048]{0}', space=smem, size = 0x800, scoped, tag = 'input window, operand 0, single buffered']
    #allocation3 [shape = 's32[1]{0}', space=sflag, size = 0x4, scoped, tag = 'scoped memory for tpu_custom_call.1']
    #allocation4 [shape = 's32[1]{0}', space=sflag, size = 0x4, scoped, tag = 'scoped memory for tpu_custom_call.1']
    #allocation5 [shape = 's32[1]{0}', space=sflag, size = 0x4, scoped, tag = 'scoped memory for tpu_custom_call.1']
    #allocation6 [shape = 's32[1]{0}', space=sflag, size = 0x4, scoped, tag = 'scoped memory for tpu_custom_call.1']
    #allocation7 [shape = 'u8[2048]{0}', space=smem, size = 0x800, scoped, tag = 'input window, operand 1, single buffered']
    #allocation8 [shape = 's32[1]{0}', space=sflag, size = 0x4, scoped, tag = 'scoped memory for tpu_custom_call.1']
    #allocation9 [shape = 'u8[2048]{0}', space=smem, size = 0x800, scoped, tag = 'input window, operand 2, single buffered']
    #allocation10 [shape = 'u8[512]{0}', space=smem, size = 0x200, scoped, tag = 'input window, operand 3, single buffered']
    #allocation11 [shape = 's32[1]{0}', space=sflag, size = 0x4, scoped, tag = 'scoped memory for tpu_custom_call.1']
    #allocation12 [shape = 'u8[512]{0}', space=smem, size = 0x200, scoped, tag = 'input window, operand 4, single buffered']
    #allocation13 [shape = 'u8[512]{0}', space=smem, size = 0x200, scoped, tag = 'input window, operand 5, single buffered']
    #allocation14 [shape = 's32[1]{0}', space=sflag, size = 0x4, scoped, tag = 'scoped memory for tpu_custom_call.1']
    #allocation15 [shape = 'u8[24576]{0}', space=vmem, size = 0x6000, scoped, tag = 'input window, operand 6, single buffered']
    #allocation16 [shape = 'u8[24576]{0}', space=vmem, size = 0x6000, scoped, tag = 'input window, operand 7, single buffered']
    #allocation17 [shape = 's32[1]{0}', space=sflag, size = 0x4, scoped, tag = 'scoped memory for tpu_custom_call.1']
    #allocation18 [shape = 'u8[24576]{0}', space=vmem, size = 0x6000, scoped, tag = 'input window, operand 8, single buffered']
    #allocation19 [shape = 'u8[24576]{0}', space=vmem, size = 0x6000, scoped, tag = 'output window, operand 0, single buffered']
    %14 = vsyncpa [#allocation5], 0
    %15 = vsyncpa [#allocation8], 0
    %16 = vsyncpa [#allocation6], 0
    %17 = vsyncpa [#allocation11], 0
    %18 = vsyncpa [#allocation14], 0
    %19 = vsyncpa [#allocation3], 0
    %20 = vsyncpa [#allocation17], 0
    %21 = vsyncpa [#allocation4], 0
    // Predicated region
    $region2: #{tpu_custom_call.1} parent=1 // pred_check
      _
    $region3: #{tpu_custom_call.1} parent=1 // pred_check_branch
      %23 = sbr.rel (0) target = $region5
    $region4: #{tpu_custom_call.1} parent=1 // pred_region
      %s25 = ssub.s32 64, 64
      %26 = vsyncadd [#allocation5], %s25
      %29 = dma.hbm_to_smem %s0, 64, [#allocation2], [#allocation5]
    $region5: #{tpu_custom_call.1} parent=1 // pred_fallthru
      _
    // Predicated region
    $region6: #{tpu_custom_call.1} parent=1 // pred_check
      _
    $region7: #{tpu_custom_call.1} parent=1 // pred_check_branch
      %31 = sbr.rel (0) target = $region9
    $region8: #{tpu_custom_call.1} parent=1 // pred_region
      %s33 = ssub.s32 64, 64
      %34 = vsyncadd [#allocation8], %s33
      %37 = dma.hbm_to_smem %s1, 64, [#allocation7], [#allocation8]
    $region9: #{tpu_custom_call.1} parent=1 // pred_fallthru
      _
    // Predicated region
    $region10: #{tpu_custom_call.1} parent=1 // pred_check
      _
    $region11: #{tpu_custom_call.1} parent=1 // pred_check_branch
      %39 = sbr.rel (0) target = $region13
    $region12: #{tpu_custom_call.1} parent=1 // pred_region
      %s41 = ssub.s32 64, 64
      %42 = vsyncadd [#allocation6], %s41
      %s44 = sshll.u32 %s2, 4
      %s45 = int_to_ptr.vmem [resolvable:$true] %s44
      %47 = dma.vmem_to_smem %s45, 64, [#allocation9], [#allocation6]
    $region13: #{tpu_custom_call.1} parent=1 // pred_fallthru
      _
    // Predicated region
    $region14: #{tpu_custom_call.1} parent=1 // pred_check
      _
    $region15: #{tpu_custom_call.1} parent=1 // pred_check_branch
      %49 = sbr.rel (0) target = $region17
    $region16: #{tpu_custom_call.1} parent=1 // pred_region
      %s51 = ssub.s32 16, 16
      %52 = vsyncadd [#allocation11], %s51
      %s54 = sshll.u32 %s3, 4
      %s55 = int_to_ptr.vmem [resolvable:$true] %s54
      %57 = dma.vmem_to_smem %s55, 16, [#allocation10], [#allocation11]
    $region17: #{tpu_custom_call.1} parent=1 // pred_fallthru
      _
    // Predicated region
    $region18: #{tpu_custom_call.1} parent=1 // pred_check
      _
    $region19: #{tpu_custom_call.1} parent=1 // pred_check_branch
      %59 = sbr.rel (0) target = $region21
    $region20: #{tpu_custom_call.1} parent=1 // pred_region
      %s61 = ssub.s32 16, 16
      %62 = vsyncadd [#allocation11], %s61
      %s64 = sshll.u32 %s4, 4
      %s65 = int_to_ptr.vmem [resolvable:$true] %s64
      %67 = dma.vmem_to_smem %s65, 16, [#allocation12], [#allocation11]
    $region21: #{tpu_custom_call.1} parent=1 // pred_fallthru
      _
    // Predicated region
    $region22: #{tpu_custom_call.1} parent=1 // pred_check
      _
    $region23: #{tpu_custom_call.1} parent=1 // pred_check_branch
      %69 = sbr.rel (0) target = $region25
    $region24: #{tpu_custom_call.1} parent=1 // pred_region
      %s71 = ssub.s32 16, 16
      %72 = vsyncadd [#allocation14], %s71
      %s74 = sshll.u32 %s5, 4
      %s75 = int_to_ptr.vmem [resolvable:$true] %s74
      %77 = dma.vmem_to_smem %s75, 16, [#allocation13], [#allocation14]
    $region25: #{tpu_custom_call.1} parent=1 // pred_fallthru
      _
    // Predicated region
    $region26: #{tpu_custom_call.1} parent=1 // pred_check
      _
    $region27: #{tpu_custom_call.1} parent=1 // pred_check_branch
      %79 = sbr.rel (0) target = $region29
    $region28: #{tpu_custom_call.1} parent=1 // pred_region
      %s81 = ssub.s32 768, 768
      %82 = vsyncadd [#allocation3], %s81
      %s83 = sshll.u32 [#allocation15], 4
      %s84 = int_to_ptr.vmem [resolvable:$true] %s83
      %89 = dma.hbm_to_vmem [thread:$0]  %s6, 768, %s84, [#allocation3], 256, 256, 16
    $region29: #{tpu_custom_call.1} parent=1 // pred_fallthru
      _
    // Predicated region
    $region30: #{tpu_custom_call.1} parent=1 // pred_check
      _
    $region31: #{tpu_custom_call.1} parent=1 // pred_check_branch
      %91 = sbr.rel (0) target = $region33
    $region32: #{tpu_custom_call.1} parent=1 // pred_region
      %s93 = ssub.s32 768, 768
      %94 = vsyncadd [#allocation17], %s93
      %s95 = sshll.u32 [#allocation16], 4
      %s96 = int_to_ptr.vmem [resolvable:$true] %s95
      %101 = dma.hbm_to_vmem [thread:$0]  %s7, 768, %s96, [#allocation17], 256, 256, 16
    $region33: #{tpu_custom_call.1} parent=1 // pred_fallthru
      _
    // Predicated region
    $region34: #{tpu_custom_call.1} parent=1 // pred_check
      _
    $region35: #{tpu_custom_call.1} parent=1 // pred_check_branch
      %103 = sbr.rel (0) target = $region37
    $region36: #{tpu_custom_call.1} parent=1 // pred_region
      %s105 = ssub.s32 768, 768
      %106 = vsyncadd [#allocation17], %s105
      %s107 = sshll.u32 [#allocation18], 4
      %s108 = int_to_ptr.vmem [resolvable:$true] %s107
      %113 = dma.hbm_to_vmem [thread:$0]  %s8, 768, %s108, [#allocation17], 256, 256, 16
    $region37: #{tpu_custom_call.1} parent=1 // pred_fallthru
      _
    // Predicated region
    $region38: #{tpu_custom_call.1} parent=1 // pred_check
      _
    $region39: #{tpu_custom_call.1} parent=1 // pred_check_branch
      %115 = sbr.rel (0) target = $region41
    $region40: #{tpu_custom_call.1} parent=1 // pred_region
      %116 = dma.done [#allocation5], 64
    $region41: #{tpu_custom_call.1} parent=1 // pred_fallthru
      _
    // Predicated region
    $region42: #{tpu_custom_call.1} parent=1 // pred_check
      _
    $region43: #{tpu_custom_call.1} parent=1 // pred_check_branch
      %118 = sbr.rel (0) target = $region45
    $region44: #{tpu_custom_call.1} parent=1 // pred_region
      %119 = dma.done [#allocation8], 64
    $region45: #{tpu_custom_call.1} parent=1 // pred_fallthru
      _
    // Predicated region
    $region46: #{tpu_custom_call.1} parent=1 // pred_check
      _
    $region47: #{tpu_custom_call.1} parent=1 // pred_check_branch
      %121 = sbr.rel (0) target = $region49
    $region48: #{tpu_custom_call.1} parent=1 // pred_region
      %122 = dma.done [#allocation6], 64
    $region49: #{tpu_custom_call.1} parent=1 // pred_fallthru
      _
    // Predicated region
    $region50: #{tpu_custom_call.1} parent=1 // pred_check
      _
    $region51: #{tpu_custom_call.1} parent=1 // pred_check_branch
      %124 = sbr.rel (0) target = $region53
    $region52: #{tpu_custom_call.1} parent=1 // pred_region
      %125 = dma.done [#allocation11], 16
    $region53: #{tpu_custom_call.1} parent=1 // pred_fallthru
      _
    // Predicated region
    $region54: #{tpu_custom_call.1} parent=1 // pred_check
      _
    $region55: #{tpu_custom_call.1} parent=1 // pred_check_branch
      %127 = sbr.rel (0) target = $region57
    $region56: #{tpu_custom_call.1} parent=1 // pred_region
      %128 = dma.done [#allocation11], 16
    $region57: #{tpu_custom_call.1} parent=1 // pred_fallthru
      _
    // Predicated region
    $region58: #{tpu_custom_call.1} parent=1 // pred_check
      _
    $region59: #{tpu_custom_call.1} parent=1 // pred_check_branch
      %130 = sbr.rel (0) target = $region61
    $region60: #{tpu_custom_call.1} parent=1 // pred_region
      %131 = dma.done [#allocation14], 16
    $region61: #{tpu_custom_call.1} parent=1 // pred_fallthru
      _
    // Predicated region
    $region62: #{tpu_custom_call.1} parent=1 // pred_check
      _
    $region63: #{tpu_custom_call.1} parent=1 // pred_check_branch
      %133 = sbr.rel (0) target = $region65
    $region64: #{tpu_custom_call.1} parent=1 // pred_region
      %134 = dma.done [#allocation3], 768
    $region65: #{tpu_custom_call.1} parent=1 // pred_fallthru
      _
    // Predicated region
    $region66: #{tpu_custom_call.1} parent=1 // pred_check
      _
    $region67: #{tpu_custom_call.1} parent=1 // pred_check_branch
      %136 = sbr.rel (0) target = $region69
    $region68: #{tpu_custom_call.1} parent=1 // pred_region
      %137 = dma.done [#allocation17], 768
    $region69: #{tpu_custom_call.1} parent=1 // pred_fallthru
      _
    // Predicated region
    $region70: #{tpu_custom_call.1} parent=1 // pred_check
      _
    $region71: #{tpu_custom_call.1} parent=1 // pred_check_branch
      %139 = sbr.rel (0) target = $region73
    $region72: #{tpu_custom_call.1} parent=1 // pred_region
      %140 = dma.done [#allocation17], 768
    $region73: #{tpu_custom_call.1} parent=1 // pred_fallthru
      _
    %141 = sfence
    %v142 = vld [vmem:[#allocation15] sm:$0xff]
    %v143 = vld [vmem:[#allocation15 + $0x8] sm:$0xff]
    %s144 = scalar_lea.vmem [#allocation15], 16
    %v145 = vld [vmem:[%s144] sm:$0xff]
    %v146 = vld [vmem:[%s144 + $0x8] sm:$0xff]
    %s147 = scalar_lea.vmem [#allocation15], 32
    %v148 = vld [vmem:[%s147] sm:$0xff]
    %v149 = vld [vmem:[%s147 + $0x8] sm:$0xff]
    %s150 = sld [smem:[#allocation10]]
    %v151 = vld [vmem:[#allocation16] sm:$0xff]
    %v152 = vld [vmem:[#allocation16 + $0x8] sm:$0xff]
    %v153 = vstv %s150
    %v154 = vsub.f32 %v153, %v151
    %v155 = vsub.f32 %v153, %v152
    %s156 = sld [smem:[#allocation2]]
    %v157 = vstv %s156
    %v158 = vmul.f32 %v157, %v142
    %v159 = vmul.f32 %v157, %v143
    %v160 = vadd.f32 %v154, %v158
    %v161 = vadd.f32 %v155, %v159
    %s162 = sld [smem:[#allocation2 + $0x1]]
    %v163 = vstv %s162
    %v164 = vmul.f32 %v163, %v145
    %v165 = vmul.f32 %v163, %v146
    %v166 = vadd.f32 %v160, %v164
    %v167 = vadd.f32 %v161, %v165
    %s168 = sld [smem:[#allocation2 + $0x2]]
    %v169 = vstv %s168
    %v170 = vmul.f32 %v169, %v148
    %v171 = vmul.f32 %v169, %v149
    %v172 = vadd.f32 %v166, %v170
    %v173 = vadd.f32 %v167, %v171
    %v174 = vmax.f32 %v172, 0.0
    %v175 = vmax.f32 %v173, 0.0
    %s176 = sld [smem:[#allocation10 + $0x1]]
    %s177 = scalar_lea.vmem [#allocation16], 16
    %v178 = vld [vmem:[%s177] sm:$0xff]
    %v179 = vld [vmem:[%s177 + $0x8] sm:$0xff]
    %v180 = vstv %s176
    %v181 = vsub.f32 %v180, %v178
    %v182 = vsub.f32 %v180, %v179
    %s183 = sld [smem:[#allocation2 + $0x80]]
    %v184 = vstv %s183
    %v185 = vmul.f32 %v184, %v142
    %v186 = vmul.f32 %v184, %v143
    %v187 = vadd.f32 %v181, %v185
    %v188 = vadd.f32 %v182, %v186
    %s189 = sld [smem:[#allocation2 + $0x81]]
    %v190 = vstv %s189
    %v191 = vmul.f32 %v190, %v145
    %v192 = vmul.f32 %v190, %v146
    %v193 = vadd.f32 %v187, %v191
    %v194 = vadd.f32 %v188, %v192
    %s195 = sld [smem:[#allocation2 + $0x82]]
    %v196 = vstv %s195
    %v197 = vmul.f32 %v196, %v148
    %v198 = vmul.f32 %v196, %v149
    %v199 = vadd.f32 %v193, %v197
    %v200 = vadd.f32 %v194, %v198
    %v201 = vmax.f32 %v199, 0.0
    %v202 = vmax.f32 %v200, 0.0
    %s203 = sld [smem:[#allocation10 + $0x2]]
    %s204 = scalar_lea.vmem [#allocation16], 32
    %v205 = vld [vmem:[%s204] sm:$0xff]
    %v206 = vld [vmem:[%s204 + $0x8] sm:$0xff]
    %v207 = vstv %s203
    %v208 = vsub.f32 %v207, %v205
    %v209 = vsub.f32 %v207, %v206
    %s210 = sld [smem:[#allocation2 + $0x100]]
    %v211 = vstv %s210
    %v212 = vmul.f32 %v211, %v142
    %v213 = vmul.f32 %v211, %v143
    %v214 = vadd.f32 %v208, %v212
    %v215 = vadd.f32 %v209, %v213
    %s216 = sld [smem:[#allocation2 + $0x101]]
    %v217 = vstv %s216
    %v218 = vmul.f32 %v217, %v145
    %v219 = vmul.f32 %v217, %v146
    %v220 = vadd.f32 %v214, %v218
    %v221 = vadd.f32 %v215, %v219
    %s222 = sld [smem:[#allocation2 + $0x102]]
    %v223 = vstv %s222
    %v224 = vmul.f32 %v223, %v148
    %v225 = vmul.f32 %v223, %v149
    %v226 = vadd.f32 %v220, %v224
    %v227 = vadd.f32 %v221, %v225
    %v228 = vmax.f32 %v226, 0.0
    %v229 = vmax.f32 %v227, 0.0
    %s230 = sld [smem:[#allocation12]]
    %v231 = vld [vmem:[#allocation18] sm:$0xff]
    %v232 = vld [vmem:[#allocation18 + $0x8] sm:$0xff]
    %v233 = vstv %s230
    %v234 = vsub.f32 %v233, %v231
    %v235 = vsub.f32 %v233, %v232
    %s236 = sld [smem:[#allocation7]]
    %v237 = vstv %s236
    %v238 = vmul.f32 %v237, %v174
    %v239 = vmul.f32 %v237, %v175
    %v240 = vadd.f32 %v234, %v238
    %v241 = vadd.f32 %v235, %v239
    %s242 = sld [smem:[#allocation7 + $0x1]]
    %v243 = vstv %s242
    %v244 = vmul.f32 %v243, %v201
    %v245 = vmul.f32 %v243, %v202
    %v246 = vadd.f32 %v240, %v244
    %v247 = vadd.f32 %v241, %v245
    %s248 = sld [smem:[#allocation7 + $0x2]]
    %v249 = vstv %s248
    %v250 = vmul.f32 %v249, %v228
    %v251 = vmul.f32 %v249, %v229
    %v252 = vadd.f32 %v246, %v250
    %v253 = vadd.f32 %v247, %v251
    %v254 = vmax.f32 %v252, 0.0
    %v255 = vmax.f32 %v253, 0.0
    %s256 = sld [smem:[#allocation12 + $0x1]]
    %s257 = scalar_lea.vmem [#allocation18], 16
    %v258 = vld [vmem:[%s257] sm:$0xff]
    %v259 = vld [vmem:[%s257 + $0x8] sm:$0xff]
    %v260 = vstv %s256
    %v261 = vsub.f32 %v260, %v258
    %v262 = vsub.f32 %v260, %v259
    %s263 = sld [smem:[#allocation7 + $0x80]]
    %v264 = vstv %s263
    %v265 = vmul.f32 %v264, %v174
    %v266 = vmul.f32 %v264, %v175
    %v267 = vadd.f32 %v261, %v265
    %v268 = vadd.f32 %v262, %v266
    %s269 = sld [smem:[#allocation7 + $0x81]]
    %v270 = vstv %s269
    %v271 = vmul.f32 %v270, %v201
    %v272 = vmul.f32 %v270, %v202
    %v273 = vadd.f32 %v267, %v271
    %v274 = vadd.f32 %v268, %v272
    %s275 = sld [smem:[#allocation7 + $0x82]]
    %v276 = vstv %s275
    %v277 = vmul.f32 %v276, %v228
    %v278 = vmul.f32 %v276, %v229
    %v279 = vadd.f32 %v273, %v277
    %v280 = vadd.f32 %v274, %v278
    %v281 = vmax.f32 %v279, 0.0
    %v282 = vmax.f32 %v280, 0.0
    %s283 = sld [smem:[#allocation12 + $0x2]]
    %s284 = scalar_lea.vmem [#allocation18], 32
    %v285 = vld [vmem:[%s284] sm:$0xff]
    %v286 = vld [vmem:[%s284 + $0x8] sm:$0xff]
    %v287 = vstv %s283
    %v288 = vsub.f32 %v287, %v285
    %v289 = vsub.f32 %v287, %v286
    %s290 = sld [smem:[#allocation7 + $0x100]]
    %v291 = vstv %s290
    %v292 = vmul.f32 %v291, %v174
    %v293 = vmul.f32 %v291, %v175
    %v294 = vadd.f32 %v288, %v292
    %v295 = vadd.f32 %v289, %v293
    %s296 = sld [smem:[#allocation7 + $0x101]]
    %v297 = vstv %s296
    %v298 = vmul.f32 %v297, %v201
    %v299 = vmul.f32 %v297, %v202
    %v300 = vadd.f32 %v294, %v298
    %v301 = vadd.f32 %v295, %v299
    %s302 = sld [smem:[#allocation7 + $0x102]]
    %v303 = vstv %s302
    %v304 = vmul.f32 %v303, %v228
    %v305 = vmul.f32 %v303, %v229
    %v306 = vadd.f32 %v300, %v304
    %v307 = vadd.f32 %v301, %v305
    %v308 = vmax.f32 %v306, 0.0
    %v309 = vmax.f32 %v307, 0.0
    %s310 = sld [smem:[#allocation9]]
    %v311 = vstv %s310
    %v312 = vmul.f32 %v311, %v254
    %v313 = vmul.f32 %v311, %v255
    %s314 = sld [smem:[#allocation13]]
    %v315 = vstv %s314
    %v316 = vadd.f32 %v312, %v315
    %v317 = vadd.f32 %v313, %v315
    %s318 = sld [smem:[#allocation9 + $0x1]]
    %v319 = vstv %s318
    %v320 = vmul.f32 %v319, %v281
    %v321 = vmul.f32 %v319, %v282
    %v322 = vadd.f32 %v316, %v320
    %v323 = vadd.f32 %v317, %v321
    %s324 = sld [smem:[#allocation9 + $0x2]]
    %v325 = vstv %s324
    %v326 = vmul.f32 %v325, %v308
    %v327 = vmul.f32 %v325, %v309
    %v328 = vadd.f32 %v322, %v326
    %v329 = vadd.f32 %v323, %v327
    %330 = vst [vmem:[#allocation19] sm:$0xff] %v328
    %vm331 = vcmask 277504
    %332 = vst.msk [vmem:[#allocation19 + $0x8] sm:$0xff] %vm331, %v329
    %s333 = sld [smem:[#allocation9 + $0x80]]
    %v334 = vstv %s333
    %v335 = vmul.f32 %v334, %v254
    %v336 = vmul.f32 %v334, %v255
    %s337 = sld [smem:[#allocation13 + $0x1]]
    %v338 = vstv %s337
    %v339 = vadd.f32 %v335, %v338
    %v340 = vadd.f32 %v336, %v338
    %s341 = sld [smem:[#allocation9 + $0x81]]
    %v342 = vstv %s341
    %v343 = vmul.f32 %v342, %v281
    %v344 = vmul.f32 %v342, %v282
    %v345 = vadd.f32 %v339, %v343
    %v346 = vadd.f32 %v340, %v344
    %s347 = sld [smem:[#allocation9 + $0x82]]
    %v348 = vstv %s347
    %v349 = vmul.f32 %v348, %v308
    %v350 = vmul.f32 %v348, %v309
    %v351 = vadd.f32 %v345, %v349
    %v352 = vadd.f32 %v346, %v350
    %s353 = scalar_lea.vmem [#allocation19], 16
    %354 = vst [vmem:[%s353] sm:$0xff] %v351
    %355 = vst.msk [vmem:[%s353 + $0x8] sm:$0xff] %vm331, %v352
    %s356 = sld [smem:[#allocation9 + $0x100]]
    %v357 = vstv %s356
    %v358 = vmul.f32 %v357, %v254
    %v359 = vmul.f32 %v357, %v255
    %s360 = sld [smem:[#allocation13 + $0x2]]
    %v361 = vstv %s360
    %v362 = vadd.f32 %v358, %v361
    %v363 = vadd.f32 %v359, %v361
    %s364 = sld [smem:[#allocation9 + $0x101]]
    %v365 = vstv %s364
    %v366 = vmul.f32 %v365, %v281
    %v367 = vmul.f32 %v365, %v282
    %v368 = vadd.f32 %v362, %v366
    %v369 = vadd.f32 %v363, %v367
    %s370 = sld [smem:[#allocation9 + $0x102]]
    %v371 = vstv %s370
    %v372 = vmul.f32 %v371, %v308
    %v373 = vmul.f32 %v371, %v309
    %v374 = vadd.f32 %v368, %v372
    %v375 = vadd.f32 %v369, %v373
    %s376 = scalar_lea.vmem [#allocation19], 32
    %377 = vst [vmem:[%s376] sm:$0xff] %v374
    %378 = vst.msk [vmem:[%s376 + $0x8] sm:$0xff] %vm331, %v375
    // Predicated region
    $region74: #{tpu_custom_call.1} parent=1 // pred_check
      _
    $region75: #{tpu_custom_call.1} parent=1 // pred_check_branch
      %380 = sbr.rel (0) target = $region77
    $region76: #{tpu_custom_call.1} parent=1 // pred_region
      %s382 = ssub.s32 768, 768
      %383 = vsyncadd [#allocation4], %s382
      %s384 = sshll.u32 [#allocation19], 4
      %s385 = int_to_ptr.vmem [resolvable:$true] %s384
      %390 = dma.vmem_to_hbm [thread:$0]  %s385, 768, %s9, [#allocation4], 256, 256, 16
    $region77: #{tpu_custom_call.1} parent=1 // pred_fallthru
      _
    // Predicated region
    $region78: #{tpu_custom_call.1} parent=1 // pred_check
      _
    $region79: #{tpu_custom_call.1} parent=1 // pred_check_branch
      %392 = sbr.rel (0) target = $region81
    $region80: #{tpu_custom_call.1} parent=1 // pred_region
      %393 = dma.done [#allocation4], 768
    $region81: #{tpu_custom_call.1} parent=1 // pred_fallthru
      _
    %394 = vsyncpa [#allocation3], 1
    %395 = vsyncpa [#allocation17], 1
    %396 = vsyncpa [#allocation4], 1
    %397 = vsyncpa [#allocation5], 1
    %398 = vsyncpa [#allocation8], 1
    %399 = vsyncpa [#allocation6], 1
    %400 = vsyncpa [#allocation11], 1
    %401 = vsyncpa [#allocation14], 1

</llo_original>
